<compile_context>
chip_gen: v7x
topology: tpu7x:2x2x1
jax: 0.10.0
libtpu: 0.0.40
codegen_flags: <defaults>
</compile_context>

<pallas_src>
import jax
import jax.numpy as jnp
from jax.experimental import pallas as pl
from jax.experimental.pallas import tpu as pltpu


def _round_up(x, m):
    return (x + m - 1) // m * m


def cbow_kernel(counts_ref, t_ref, b1_ref, w2_ref, b2_ref, out_ref):
    """One grid step computes a (tb, V_pad) tile of log-probabilities.

    counts_ref: (tb, VK)   context-word count matrix
    t_ref:      (VK, H)    folded emb @ w1
    b1_ref:     (1, H)
    w2_ref:     (H, V_pad) pad columns are exactly zero
    b2_ref:     (1, V_pad) pad lanes are -1e30 (mask baked into bias)
    """
    # Embedding gather-sum + Linear1, fused into one MXU matmul:
    #   sum_c emb[id_c] @ w1  ==  counts @ (emb @ w1)
    h = jnp.dot(counts_ref[...], t_ref[...],
                preferred_element_type=jnp.float32) + b1_ref[...]      # (tb, H)
    h = jnp.maximum(h, 0.0)                                            # ReLU

    # Linear2 on the lane-dense (padded) vocab. Padded lanes get -1e30 from b2
    # (w2 pad columns are zero), so they vanish in the softmax normalizer.
    logits = jnp.dot(h, w2_ref[...],
                     preferred_element_type=jnp.float32) + b2_ref[...]  # (tb, V_pad)

    # Numerically stable log-softmax along the vocab axis.
    m = jnp.max(logits, axis=-1, keepdims=True)
    shifted = logits - m
    lse = jnp.log(jnp.sum(jnp.exp(shifted), axis=-1, keepdims=True))
    out_ref[...] = shifted - lse


def cbow_forward(context_ids, emb, w1, b1, w2, b2, *, tb=None):
    """Batched CBOW forward. context_ids: (B, C) int32. Returns (B, V) log-probs.

    tb=None -> single grid step over the whole batch (best on v5e/v6e).
    tb=B//2 -> 2-step "parallel" grid (lets v7x's two TensorCores split the work).
    """
    V, E = emb.shape
    H = w1.shape[1]
    B, C = context_ids.shape

    V_pad = _round_up(V, 128)        # lane-dense output / w2 cols / b2
    VK = _round_up(V, 128)           # contraction axis for the count matmul
    if tb is None:
        tb = B
    tb = max(8, _round_up(tb, 8))    # sublane-aligned batch tile
    B_pad = _round_up(B, tb)

    # --- weight prep (one-time, outside the hot path) ---
    # Fold embedding table into linear1: T = emb @ w1, shape (V, H).
    t_p = jnp.pad(emb @ w1, ((0, VK - V), (0, 0)))          # zero rows -> no effect
    b1_p = b1.reshape(1, H)
    w2_p = jnp.pad(w2, ((0, 0), (0, V_pad - V)))            # pad cols exactly zero
    b2_p = jnp.pad(b2.reshape(1, V), ((0, 0), (0, V_pad - V)),
                   constant_values=-1e30)                   # mask baked into bias

    # --- per-example count matrix: counts[b, v] = #occurrences of v in context b ---
    counts = jax.nn.one_hot(context_ids, VK, dtype=jnp.float32).sum(axis=1)  # (B, VK)
    if B_pad != B:
        counts = jnp.pad(counts, ((0, B_pad - B), (0, 0)))  # zero rows, discarded

    grid = (B_pad // tb,)

    out = pl.pallas_call(
        cbow_kernel,
        out_shape=jax.ShapeDtypeStruct((B_pad, V_pad), jnp.float32),
        grid_spec=pltpu.PrefetchScalarGridSpec(
            num_scalar_prefetch=0,
            grid=grid,
            in_specs=[
                pl.BlockSpec((tb, VK), lambda i: (i, 0)),      # counts (batch-tiled)
                pl.BlockSpec((VK, H), lambda i: (0, 0)),       # T = emb @ w1 (resident)
                pl.BlockSpec((1, H), lambda i: (0, 0)),        # b1
                pl.BlockSpec((H, V_pad), lambda i: (0, 0)),    # w2
                pl.BlockSpec((1, V_pad), lambda i: (0, 0)),    # b2 (with -1e30 pad)
            ],
            out_specs=pl.BlockSpec((tb, V_pad), lambda i: (i, 0)),
        ),
        compiler_params=pltpu.CompilerParams(
            dimension_semantics=("parallel",)),
        # TODO(synk): at real-vocab scale (V_pad ~ 32k) add a vocab grid axis tiling
        # w2/b2/out and set vmem_limit_bytes; unnecessary at these toy sizes.
    )(counts, t_p, b1_p, w2_p, b2_p)

    return out[:B, :V]


def cbow_reference(context_ids, emb, w1, b1, w2, b2):
    embeds = jnp.sum(emb[context_ids], axis=1)          # (B, E)
    h = jnp.maximum(embeds @ w1 + b1, 0.0)
    logits = h @ w2 + b2
    return jax.nn.log_softmax(logits, axis=-1)


if __name__ == "__main__":
    # Shapes implied by the module: vocab ~60 (unique words of the longest
    # sentence), embedding_dim=20, hidden=128, context window of 4 words.
    VOCAB_SIZE = 60
    EMBED_DIM = 20
    HIDDEN = 128
    CONTEXT = 4
    BATCH = 64            # a batch of CBOW training examples (one kernel call)

    key = jax.random.PRNGKey(0)
    k_emb, k_w1, k_b1, k_w2, k_b2, k_ids = jax.random.split(key, 6)

    emb = jax.random.normal(k_emb, (VOCAB_SIZE, EMBED_DIM), jnp.float32)
    w1 = jax.random.normal(k_w1, (EMBED_DIM, HIDDEN), jnp.float32) * 0.1
    b1 = jax.random.normal(k_b1, (HIDDEN,), jnp.float32) * 0.1
    w2 = jax.random.normal(k_w2, (HIDDEN, VOCAB_SIZE), jnp.float32) * 0.1
    b2 = jax.random.normal(k_b2, (VOCAB_SIZE,), jnp.float32) * 0.1

    context_ids = jax.random.randint(
        k_ids, (BATCH, CONTEXT), 0, VOCAB_SIZE, jnp.int32)

    # Single grid step over the whole batch (use tb=BATCH//2 on v7x for 2 TCs).
    out = cbow_forward(context_ids, emb, w1, b1, w2, b2, tb=None)
    out = jax.block_until_ready(out)

    ref = cbow_reference(context_ids, emb, w1, b1, w2, b2)
    assert out.shape == (BATCH, VOCAB_SIZE)
    assert jnp.allclose(out, ref, atol=1e-4, rtol=1e-4), "mismatch vs pure-JAX reference"

    print("KERNEL_OK")
</pallas_src>

<mosaic_0001>
module attributes {stable_mosaic.version = 11 : i64} {
  func.func @cbow_kernel(%arg0: i32, %arg1: memref<64x128xf32, #tpu.memory_space<vmem>>, %arg2: memref<128x128xf32, #tpu.memory_space<vmem>>, %arg3: memref<1x128xf32, #tpu.memory_space<vmem>>, %arg4: memref<128x128xf32, #tpu.memory_space<vmem>>, %arg5: memref<1x128xf32, #tpu.memory_space<vmem>>, %arg6: memref<64x128xf32, #tpu.memory_space<vmem>>) attributes {dimension_semantics = [#tpu.dimension_semantics<parallel>], iteration_bounds = array<i64: 1>, scalar_prefetch = 0 : i64, scratch_operands = 0 : i64, tpu.core_type = #tpu.core_type<tc>, window_params = [{transform_indices = @transform_0, window_bounds = array<i64: 64, 128>}, {pipeline_mode = #tpu.pipeline_mode<synchronous>, transform_indices = @transform_1, window_bounds = array<i64: 128, 128>}, {pipeline_mode = #tpu.pipeline_mode<synchronous>, transform_indices = @transform_2, window_bounds = array<i64: 1, 128>}, {pipeline_mode = #tpu.pipeline_mode<synchronous>, transform_indices = @transform_3, window_bounds = array<i64: 128, 128>}, {pipeline_mode = #tpu.pipeline_mode<synchronous>, transform_indices = @transform_4, window_bounds = array<i64: 1, 128>}, {transform_indices = @transform_5, window_bounds = array<i64: 64, 128>}]} {
    %c0 = arith.constant 0 : index
    %c0_0 = arith.constant 0 : index
    %0 = vector.load %arg1[%c0, %c0_0] : memref<64x128xf32, #tpu.memory_space<vmem>>, vector<64x128xf32>
    %c0_1 = arith.constant 0 : index
    %c0_2 = arith.constant 0 : index
    %1 = vector.load %arg2[%c0_1, %c0_2] : memref<128x128xf32, #tpu.memory_space<vmem>>, vector<128x128xf32>
    %cst = arith.constant dense<0.000000e+00> : vector<64x128xf32>
    %2 = tpu.matmul %0, %1, %cst {dimension_numbers = #tpu.dot_dimension_numbers<[1], [0], [0], [1], [0, 0, 1, 1], [], []>} : vector<64x128xf32>, vector<128x128xf32>, vector<64x128xf32> -> vector<64x128xf32>
    %c0_3 = arith.constant 0 : index
    %c0_4 = arith.constant 0 : index
    %3 = vector.load %arg3[%c0_3, %c0_4] : memref<1x128xf32, #tpu.memory_space<vmem>>, vector<1x128xf32>
    %4 = vector.broadcast %3 : vector<1x128xf32> to vector<64x128xf32>
    %5 = arith.addf %2, %4 : vector<64x128xf32>
    %cst_5 = arith.constant 0.000000e+00 : f32
    %6 = vector.broadcast %cst_5 : f32 to vector<64x128xf32>
    %7 = arith.maximumf %5, %6 : vector<64x128xf32>
    %c0_6 = arith.constant 0 : index
    %c0_7 = arith.constant 0 : index
    %8 = vector.load %arg4[%c0_6, %c0_7] : memref<128x128xf32, #tpu.memory_space<vmem>>, vector<128x128xf32>
    %cst_8 = arith.constant dense<0.000000e+00> : vector<64x128xf32>
    %9 = tpu.matmul %7, %8, %cst_8 {dimension_numbers = #tpu.dot_dimension_numbers<[1], [0], [0], [1], [0, 0, 1, 1], [], []>} : vector<64x128xf32>, vector<128x128xf32>, vector<64x128xf32> -> vector<64x128xf32>
    %c0_9 = arith.constant 0 : index
    %c0_10 = arith.constant 0 : index
    %10 = vector.load %arg5[%c0_9, %c0_10] : memref<1x128xf32, #tpu.memory_space<vmem>>, vector<1x128xf32>
    %11 = vector.broadcast %10 : vector<1x128xf32> to vector<64x128xf32>
    %12 = arith.addf %9, %11 : vector<64x128xf32>
    %cst_11 = arith.constant dense<0xFF800000> : vector<64xf32>
    %13 = vector.multi_reduction <maximumf>, %12, %cst_11 [1] : vector<64x128xf32> to vector<64xf32>
    %14 = vector.shape_cast %13 : vector<64xf32> to vector<64x1xf32>
    %15 = vector.broadcast %14 : vector<64x1xf32> to vector<64x128xf32>
    %16 = arith.subf %12, %15 : vector<64x128xf32>
    %17 = math.exp %16 : vector<64x128xf32>
    %cst_12 = arith.constant dense<0.000000e+00> : vector<64xf32>
    %18 = vector.multi_reduction <add>, %17, %cst_12 [1] : vector<64x128xf32> to vector<64xf32>
    %19 = vector.shape_cast %18 : vector<64xf32> to vector<64x1xf32>
    %20 = math.log %19 : vector<64x1xf32>
    %21 = vector.broadcast %20 : vector<64x1xf32> to vector<64x128xf32>
    %22 = arith.subf %16, %21 : vector<64x128xf32>
    %c0_13 = arith.constant 0 : index
    %c0_14 = arith.constant 0 : index
    %23 = vector.load %arg6[%c0_13, %c0_14] : memref<64x128xf32, #tpu.memory_space<vmem>>, vector<64x128xf32>
    tpu.vector_store %arg6[%c0_13, %c0_14], %22 {strides = array<i32>} : memref<64x128xf32, #tpu.memory_space<vmem>>, vector<64x128xf32>,
    return
  }
  func.func @transform_0(%arg0: i32) -> (i32, i32) {
    %c0_i32 = arith.constant 0 : i32
    %c0_i32_0 = arith.constant 0 : i32
    return %arg0, %c0_i32 : i32, i32
  }
  func.func @transform_1(%arg0: i32) -> (i32, i32) {
    %c0_i32 = arith.constant 0 : i32
    %c0_i32_0 = arith.constant 0 : i32
    %c0_i32_1 = arith.constant 0 : i32
    return %c0_i32, %c0_i32_0 : i32, i32
  }
  func.func @transform_2(%arg0: i32) -> (i32, i32) {
    %c0_i32 = arith.constant 0 : i32
    %c0_i32_0 = arith.constant 0 : i32
    %c0_i32_1 = arith.constant 0 : i32
    return %c0_i32, %c0_i32_0 : i32, i32
  }
  func.func @transform_3(%arg0: i32) -> (i32, i32) {
    %c0_i32 = arith.constant 0 : i32
    %c0_i32_0 = arith.constant 0 : i32
    %c0_i32_1 = arith.constant 0 : i32
    return %c0_i32, %c0_i32_0 : i32, i32
  }
  func.func @transform_4(%arg0: i32) -> (i32, i32) {
    %c0_i32 = arith.constant 0 : i32
    %c0_i32_0 = arith.constant 0 : i32
    %c0_i32_1 = arith.constant 0 : i32
    return %c0_i32, %c0_i32_0 : i32, i32
  }
  func.func @transform_5(%arg0: i32) -> (i32, i32) {
    %c0_i32 = arith.constant 0 : i32
    %c0_i32_0 = arith.constant 0 : i32
    return %arg0, %c0_i32 : i32, i32
  }
}

</mosaic_0001>

<llo_original>
// kernel: tpu_custom_call.1
$region0: #{tpu_custom_call.1}
  #allocation0 [shape = 'u32[]', space=smem, size = 0x4, offset = 0x4, fixed_abs, tag = 'smem constant byte address 0x4 - core index']
  #allocation1 [shape = 'u32[144,128]{1,0:T(1,128)}', space=vmem, size = 0x12000, scoped, tag = 'internal scratch']
  %s0 = inlined_call_operand.hbm [shape: f32[64,128], index: 0, kind: input, shape index: {}]
  %s1 = inlined_call_operand.hbm [shape: f32[128,128], index: 1, kind: input, shape index: {}]
  %s2 = inlined_call_operand.vmem [shape: f32[1,128], index: 2, kind: input, shape index: {}]
  %s3 = inlined_call_operand.hbm [shape: f32[128,128], index: 3, kind: input, shape index: {}]
  %s4 = inlined_call_operand.vmem [shape: f32[1,128], index: 4, kind: input, shape index: {}]
  %s5 = inlined_call_operand.hbm [shape: f32[64,128], index: 5, kind: output, shape index: {}]
  %s6 = sld [smem:[#allocation0]]
  $region42: #{tpu_custom_call.1} parent=0
    _
  %s8 = ssub.s32 1, %s6
  %s9 = scalar_select 0, %s8, %s6
  $region1: #{tpu_custom_call.1} parent=0
    #allocation2 [shape = 'u8[32768]{0}', space=vmem, size = 0x8000, scoped, tag = 'input window, operand 0, single buffered']
    #allocation3 [shape = 's32[1]{0}', space=sflag, size = 0x4, scoped, tag = 'scoped memory for tpu_custom_call.1']
    #allocation4 [shape = 's32[1]{0}', space=sflag, size = 0x4, scoped, tag = 'scoped memory for tpu_custom_call.1']
    #allocation5 [shape = 'u8[65536]{0}', space=vmem, size = 0x10000, scoped, tag = 'input window, operand 1, single buffered']
    #allocation6 [shape = 's32[1]{0}', space=sflag, size = 0x4, scoped, tag = 'scoped memory for tpu_custom_call.1']
    #allocation7 [shape = 'u8[65536]{0}', space=vmem, size = 0x10000, scoped, tag = 'input window, operand 3, single buffered']
    #allocation8 [shape = 'u8[32768]{0}', space=vmem, size = 0x8000, scoped, tag = 'output window, operand 0, single buffered']
    %10 = vsyncpa [#allocation3], 0
    %11 = vsyncpa [#allocation6], 0
    %12 = vsyncpa [#allocation4], 0
    // Predicated region
    $region2: #{tpu_custom_call.1} parent=1 // pred_check
      _
    $region3: #{tpu_custom_call.1} parent=1 // pred_check_branch
      %14 = sbr.rel (0) target = $region5
    $region4: #{tpu_custom_call.1} parent=1 // pred_region
      %s16 = ssub.s32 1024, 1024
      %17 = vsyncadd [#allocation3], %s16
      %s18 = sshll.u32 [#allocation2], 4
      %s19 = int_to_ptr.vmem [resolvable:$true] %s18
      %24 = dma.hbm_to_vmem [thread:$0]  %s0, 1024, %s19, [#allocation3], 128, 128, 8
    $region5: #{tpu_custom_call.1} parent=1 // pred_fallthru
      _
    // Predicated region
    $region6: #{tpu_custom_call.1} parent=1 // pred_check
      _
    $region7: #{tpu_custom_call.1} parent=1 // pred_check_branch
      %26 = sbr.rel (0) target = $region9
    $region8: #{tpu_custom_call.1} parent=1 // pred_region
      %s28 = ssub.s32 2048, 2048
      %29 = vsyncadd [#allocation6], %s28
      %s30 = sshll.u32 [#allocation5], 4
      %s31 = int_to_ptr.vmem [resolvable:$true] %s30
      %36 = dma.hbm_to_vmem [thread:$0]  %s1, 2048, %s31, [#allocation6], 128, 128, 8
    $region9: #{tpu_custom_call.1} parent=1 // pred_fallthru
      _
    // Predicated region
    $region10: #{tpu_custom_call.1} parent=1 // pred_check
      _
    $region11: #{tpu_custom_call.1} parent=1 // pred_check_branch
      %38 = sbr.rel (0) target = $region13
    $region12: #{tpu_custom_call.1} parent=1 // pred_region
      _
    $region13: #{tpu_custom_call.1} parent=1 // pred_fallthru
      _
    // Predicated region
    $region14: #{tpu_custom_call.1} parent=1 // pred_check
      _
    $region15: #{tpu_custom_call.1} parent=1 // pred_check_branch
      %40 = sbr.rel (0) target = $region17
    $region16: #{tpu_custom_call.1} parent=1 // pred_region
      %s42 = ssub.s32 2048, 2048
      %43 = vsyncadd [#allocation6], %s42
      %s44 = sshll.u32 [#allocation7], 4
      %s45 = int_to_ptr.vmem [resolvable:$true] %s44
      %50 = dma.hbm_to_vmem [thread:$0]  %s3, 2048, %s45, [#allocation6], 128, 128, 8
    $region17: #{tpu_custom_call.1} parent=1 // pred_fallthru
      _
    // Predicated region
    $region18: #{tpu_custom_call.1} parent=1 // pred_check
      _
    $region19: #{tpu_custom_call.1} parent=1 // pred_check_branch
      %52 = sbr.rel (0) target = $region21
    $region20: #{tpu_custom_call.1} parent=1 // pred_region
      _
    $region21: #{tpu_custom_call.1} parent=1 // pred_fallthru
      _
    // Predicated region
    $region22: #{tpu_custom_call.1} parent=1 // pred_check
      _
    $region23: #{tpu_custom_call.1} parent=1 // pred_check_branch
      %54 = sbr.rel (0) target = $region25
    $region24: #{tpu_custom_call.1} parent=1 // pred_region
      %55 = dma.done [#allocation3], 1024
    $region25: #{tpu_custom_call.1} parent=1 // pred_fallthru
      _
    // Predicated region
    $region26: #{tpu_custom_call.1} parent=1 // pred_check
      _
    $region27: #{tpu_custom_call.1} parent=1 // pred_check_branch
      %57 = sbr.rel (0) target = $region29
    $region28: #{tpu_custom_call.1} parent=1 // pred_region
      %58 = dma.done [#allocation6], 2048
    $region29: #{tpu_custom_call.1} parent=1 // pred_fallthru
      _
    // Predicated region
    $region30: #{tpu_custom_call.1} parent=1 // pred_check
      _
    $region31: #{tpu_custom_call.1} parent=1 // pred_check_branch
      %60 = sbr.rel (0) target = $region33
    $region32: #{tpu_custom_call.1} parent=1 // pred_region
      %61 = dma.done [#allocation6], 2048
    $region33: #{tpu_custom_call.1} parent=1 // pred_fallthru
      _
    %v62 = vld [vmem:[#allocation2] sm:$0xff]
    %v63 = vld [vmem:[#allocation2 + $0x8] sm:$0xff]
    %v64 = vld [vmem:[#allocation2 + $0x10] sm:$0xff]
    %v65 = vld [vmem:[#allocation2 + $0x18] sm:$0xff]
    %v66 = vld [vmem:[#allocation2 + $0x20] sm:$0xff]
    %v67 = vld [vmem:[#allocation2 + $0x28] sm:$0xff]
    %v68 = vld [vmem:[#allocation2 + $0x30] sm:$0xff]
    %v69 = vld [vmem:[#allocation2 + $0x38] sm:$0xff]
    %v70 = vld [vmem:[#allocation5] sm:$0xff]
    %v71 = vld [vmem:[#allocation5 + $0x8] sm:$0xff]
    %v72 = vld [vmem:[#allocation5 + $0x10] sm:$0xff]
    %v73 = vld [vmem:[#allocation5 + $0x18] sm:$0xff]
    %v74 = vld [vmem:[#allocation5 + $0x20] sm:$0xff]
    %v75 = vld [vmem:[#allocation5 + $0x28] sm:$0xff]
    %v76 = vld [vmem:[#allocation5 + $0x30] sm:$0xff]
    %v77 = vld [vmem:[#allocation5 + $0x38] sm:$0xff]
    %v78 = vld [vmem:[#allocation5 + $0x40] sm:$0xff]
    %v79 = vld [vmem:[#allocation5 + $0x48] sm:$0xff]
    %v80 = vld [vmem:[#allocation5 + $0x50] sm:$0xff]
    %v81 = vld [vmem:[#allocation5 + $0x58] sm:$0xff]
    %v82 = vld [vmem:[#allocation5 + $0x60] sm:$0xff]
    %v83 = vld [vmem:[#allocation5 + $0x68] sm:$0xff]
    %v84 = vld [vmem:[#allocation5 + $0x70] sm:$0xff]
    %v85 = vld [vmem:[#allocation5 + $0x78] sm:$0xff]
    %v86 = vld [vmem:[%s2] sm:$0x1]
    %v88 = vlaneseq
    %v89 = vshrl.u32 %v88, 7
    %v90 = vsub.s32 0, %v89
    %v91 = vrot.slane %v86, %v90
    %93 = vmatprep.subr.mxu0 0.0
    %94 = vmatpush1.msra.mxu0 %v70
    %95 = vmatprep.subr.mxu0 0.0
    %96 = vmatpush1.msra.mxu0 %v71
    %97 = vmatprep.subr.mxu0 0.0
    %98 = vmatpush1.msra.mxu0 %v72
    %99 = vmatprep.subr.mxu0 0.0
    %100 = vmatpush1.msra.mxu0 %v73
    %101 = vmatprep.subr.mxu0 0.0
    %102 = vmatpush1.msra.mxu0 %v74
    %103 = vmatprep.subr.mxu0 0.0
    %104 = vmatpush1.msra.mxu0 %v75
    %105 = vmatprep.subr.mxu0 0.0
    %106 = vmatpush1.msra.mxu0 %v76
    %107 = vmatprep.subr.mxu0 0.0
    %108 = vmatpush1.msra.mxu0 %v77
    %109 = vmatprep.subr.mxu0 0.0
    %110 = vmatpush1.msra.mxu0 %v78
    %111 = vmatprep.subr.mxu0 0.0
    %112 = vmatpush1.msra.mxu0 %v79
    %113 = vmatprep.subr.mxu0 0.0
    %114 = vmatpush1.msra.mxu0 %v80
    %115 = vmatprep.subr.mxu0 0.0
    %116 = vmatpush1.msra.mxu0 %v81
    %117 = vmatprep.subr.mxu0 0.0
    %118 = vmatpush1.msra.mxu0 %v82
    %119 = vmatprep.subr.mxu0 0.0
    %120 = vmatpush1.msra.mxu0 %v83
    %121 = vmatprep.subr.mxu0 0.0
    %122 = vmatpush1.msra.mxu0 %v84
    %123 = vmatprep.subr.mxu0 0.0
    %124 = vmatpush1.msra.mxu0 %v85
    %125 = vmatprep.subr.mxu0 0.0
    %126 = vmatpush1.msra.mxu0 0.0
    %127 = vmatprep.subr.mxu0 0.0
    %128 = vmatpush1.msra.mxu0 0.0
    %129 = vmatprep.subr.mxu0 0.0
    %130 = vmatpush1.msra.mxu0 0.0
    %131 = vmatprep.subr.mxu0 0.0
    %132 = vmatpush1.msra.mxu0 0.0
    %133 = vmatprep.subr.mxu0 0.0
    %134 = vmatpush1.msra.mxu0 0.0
    %135 = vmatprep.subr.mxu0 0.0
    %136 = vmatpush1.msra.mxu0 0.0
    %137 = vmatprep.subr.mxu0 0.0
    %138 = vmatpush1.msra.mxu0 0.0
    %139 = vmatprep.subr.mxu0 0.0
    %140 = vmatpush1.msra.mxu0 0.0
    %141 = vmatprep.subr.mxu0 0.0
    %142 = vmatpush1.msra.mxu0 0.0
    %143 = vmatprep.subr.mxu0 0.0
    %144 = vmatpush1.msra.mxu0 0.0
    %145 = vmatprep.subr.mxu0 0.0
    %146 = vmatpush1.msra.mxu0 0.0
    %147 = vmatprep.subr.mxu0 0.0
    %148 = vmatpush1.msra.mxu0 0.0
    %149 = vmatprep.subr.mxu0 0.0
    %150 = vmatpush1.msra.mxu0 0.0
    %151 = vmatprep.subr.mxu0 0.0
    %152 = vmatpush1.msra.mxu0 0.0
    %153 = vmatprep.subr.mxu0 0.0
    %154 = vmatpush1.msra.mxu0 0.0
    %155 = vmatprep.subr.mxu0 0.0
    %156 = vmatpush1.msra.mxu0 0.0
    %157 = vmatprep.mubr.f32.mxu0 0.0
    %158 = vmatmul.mubr.f32.gmra.mrb[0].mxu0 %v62
    %v159 = vpop.f32.mrb[0].mxu0
    %v160 = vadd.f32 %v91, %v159
    %v161 = vpop.f32.mrb[0].mxu0
    %162 = vmatprep.mubr.f32.mxu0 0.0
    %163 = vmatmul.mubr.f32.gmra.mrb[0].mxu0 %v63
    %v164 = vpop.f32.mrb[0].mxu0
    %v165 = vadd.f32 %v91, %v164
    %v166 = vpop.f32.mrb[0].mxu0
    %167 = vmatprep.mubr.f32.mxu0 0.0
    %168 = vmatmul.mubr.f32.gmra.mrb[0].mxu0 %v64
    %v169 = vpop.f32.mrb[0].mxu0
    %v170 = vadd.f32 %v91, %v169
    %v171 = vpop.f32.mrb[0].mxu0
    %172 = vmatprep.mubr.f32.mxu0 0.0
    %173 = vmatmul.mubr.f32.gmra.mrb[0].mxu0 %v65
    %v174 = vpop.f32.mrb[0].mxu0
    %v175 = vadd.f32 %v91, %v174
    %v176 = vpop.f32.mrb[0].mxu0
    %177 = vmatprep.mubr.f32.mxu0 0.0
    %178 = vmatmul.mubr.f32.gmra.mrb[0].mxu0 %v66
    %v179 = vpop.f32.mrb[0].mxu0
    %v180 = vadd.f32 %v91, %v179
    %v181 = vpop.f32.mrb[0].mxu0
    %182 = vmatprep.mubr.f32.mxu0 0.0
    %183 = vmatmul.mubr.f32.gmra.mrb[0].mxu0 %v67
    %v184 = vpop.f32.mrb[0].mxu0
    %v185 = vadd.f32 %v91, %v184
    %v186 = vpop.f32.mrb[0].mxu0
    %187 = vmatprep.mubr.f32.mxu0 0.0
    %188 = vmatmul.mubr.f32.gmra.mrb[0].mxu0 %v68
    %v189 = vpop.f32.mrb[0].mxu0
    %v190 = vadd.f32 %v91, %v189
    %v191 = vpop.f32.mrb[0].mxu0
    %192 = vmatprep.mubr.f32.mxu0 0.0
    %193 = vmatmul.mubr.f32.gmra.mrb[0].mxu0 %v69
    %v194 = vpop.f32.mrb[0].mxu0
    %v195 = vadd.f32 %v91, %v194
    %v196 = vpop.f32.mrb[0].mxu0
    %197 = vdwg.mxu0
    %v198 = vmax.f32 %v160, 0.0
    %v199 = vmax.f32 %v165, 0.0
    %v200 = vmax.f32 %v170, 0.0
    %v201 = vmax.f32 %v175, 0.0
    %v202 = vmax.f32 %v180, 0.0
    %v203 = vmax.f32 %v185, 0.0
    %v204 = vmax.f32 %v190, 0.0
    %v205 = vmax.f32 %v195, 0.0
    %v206 = vld [vmem:[#allocation7] sm:$0xff]
    %v207 = vld [vmem:[#allocation7 + $0x8] sm:$0xff]
    %v208 = vld [vmem:[#allocation7 + $0x10] sm:$0xff]
    %v209 = vld [vmem:[#allocation7 + $0x18] sm:$0xff]
    %v210 = vld [vmem:[#allocation7 + $0x20] sm:$0xff]
    %v211 = vld [vmem:[#allocation7 + $0x28] sm:$0xff]
    %v212 = vld [vmem:[#allocation7 + $0x30] sm:$0xff]
    %v213 = vld [vmem:[#allocation7 + $0x38] sm:$0xff]
    %v214 = vld [vmem:[#allocation7 + $0x40] sm:$0xff]
    %v215 = vld [vmem:[#allocation7 + $0x48] sm:$0xff]
    %v216 = vld [vmem:[#allocation7 + $0x50] sm:$0xff]
    %v217 = vld [vmem:[#allocation7 + $0x58] sm:$0xff]
    %v218 = vld [vmem:[#allocation7 + $0x60] sm:$0xff]
    %v219 = vld [vmem:[#allocation7 + $0x68] sm:$0xff]
    %v220 = vld [vmem:[#allocation7 + $0x70] sm:$0xff]
    %v221 = vld [vmem:[#allocation7 + $0x78] sm:$0xff]
    %v222 = vld [vmem:[%s4] sm:$0x1]
    %v224 = vlaneseq
    %v225 = vshrl.u32 %v224, 7
    %v226 = vsub.s32 0, %v225
    %v227 = vrot.slane %v222, %v226
    %229 = vmatprep.subr.mxu0 0.0
    %230 = vmatpush1.msra.mxu0 %v206
    %231 = vmatprep.subr.mxu0 0.0
    %232 = vmatpush1.msra.mxu0 %v207
    %233 = vmatprep.subr.mxu0 0.0
    %234 = vmatpush1.msra.mxu0 %v208
    %235 = vmatprep.subr.mxu0 0.0
    %236 = vmatpush1.msra.mxu0 %v209
    %237 = vmatprep.subr.mxu0 0.0
    %238 = vmatpush1.msra.mxu0 %v210
    %239 = vmatprep.subr.mxu0 0.0
    %240 = vmatpush1.msra.mxu0 %v211
    %241 = vmatprep.subr.mxu0 0.0
    %242 = vmatpush1.msra.mxu0 %v212
    %243 = vmatprep.subr.mxu0 0.0
    %244 = vmatpush1.msra.mxu0 %v213
    %245 = vmatprep.subr.mxu0 0.0
    %246 = vmatpush1.msra.mxu0 %v214
    %247 = vmatprep.subr.mxu0 0.0
    %248 = vmatpush1.msra.mxu0 %v215
    %249 = vmatprep.subr.mxu0 0.0
    %250 = vmatpush1.msra.mxu0 %v216
    %251 = vmatprep.subr.mxu0 0.0
    %252 = vmatpush1.msra.mxu0 %v217
    %253 = vmatprep.subr.mxu0 0.0
    %254 = vmatpush1.msra.mxu0 %v218
    %255 = vmatprep.subr.mxu0 0.0
    %256 = vmatpush1.msra.mxu0 %v219
    %257 = vmatprep.subr.mxu0 0.0
    %258 = vmatpush1.msra.mxu0 %v220
    %259 = vmatprep.subr.mxu0 0.0
    %260 = vmatpush1.msra.mxu0 %v221
    %261 = vmatprep.subr.mxu0 0.0
    %262 = vmatpush1.msra.mxu0 0.0
    %263 = vmatprep.subr.mxu0 0.0
    %264 = vmatpush1.msra.mxu0 0.0
    %265 = vmatprep.subr.mxu0 0.0
    %266 = vmatpush1.msra.mxu0 0.0
    %267 = vmatprep.subr.mxu0 0.0
    %268 = vmatpush1.msra.mxu0 0.0
    %269 = vmatprep.subr.mxu0 0.0
    %270 = vmatpush1.msra.mxu0 0.0
    %271 = vmatprep.subr.mxu0 0.0
    %272 = vmatpush1.msra.mxu0 0.0
    %273 = vmatprep.subr.mxu0 0.0
    %274 = vmatpush1.msra.mxu0 0.0
    %275 = vmatprep.subr.mxu0 0.0
    %276 = vmatpush1.msra.mxu0 0.0
    %277 = vmatprep.subr.mxu0 0.0
    %278 = vmatpush1.msra.mxu0 0.0
    %279 = vmatprep.subr.mxu0 0.0
    %280 = vmatpush1.msra.mxu0 0.0
    %281 = vmatprep.subr.mxu0 0.0
    %282 = vmatpush1.msra.mxu0 0.0
    %283 = vmatprep.subr.mxu0 0.0
    %284 = vmatpush1.msra.mxu0 0.0
    %285 = vmatprep.subr.mxu0 0.0
    %286 = vmatpush1.msra.mxu0 0.0
    %287 = vmatprep.subr.mxu0 0.0
    %288 = vmatpush1.msra.mxu0 0.0
    %289 = vmatprep.subr.mxu0 0.0
    %290 = vmatpush1.msra.mxu0 0.0
    %291 = vmatprep.subr.mxu0 0.0
    %292 = vmatpush1.msra.mxu0 0.0
    %293 = vmatprep.mubr.f32.mxu0 0.0
    %294 = vmatmul.mubr.f32.gmra.mrb[0].mxu0 %v198
    %v295 = vpop.f32.mrb[0].mxu0
    %v296 = vadd.f32 %v227, %v295
    %v297 = vpop.f32.mrb[0].mxu0
    %298 = vmatprep.mubr.f32.mxu0 0.0
    %299 = vmatmul.mubr.f32.gmra.mrb[0].mxu0 %v199
    %v300 = vpop.f32.mrb[0].mxu0
    %v301 = vadd.f32 %v227, %v300
    %v302 = vpop.f32.mrb[0].mxu0
    %303 = vmatprep.mubr.f32.mxu0 0.0
    %304 = vmatmul.mubr.f32.gmra.mrb[0].mxu0 %v200
    %v305 = vpop.f32.mrb[0].mxu0
    %v306 = vadd.f32 %v227, %v305
    %v307 = vpop.f32.mrb[0].mxu0
    %308 = vmatprep.mubr.f32.mxu0 0.0
    %309 = vmatmul.mubr.f32.gmra.mrb[0].mxu0 %v201
    %v310 = vpop.f32.mrb[0].mxu0
    %v311 = vadd.f32 %v227, %v310
    %v312 = vpop.f32.mrb[0].mxu0
    %313 = vmatprep.mubr.f32.mxu0 0.0
    %314 = vmatmul.mubr.f32.gmra.mrb[0].mxu0 %v202
    %v315 = vpop.f32.mrb[0].mxu0
    %v316 = vadd.f32 %v227, %v315
    %v317 = vpop.f32.mrb[0].mxu0
    %318 = vmatprep.mubr.f32.mxu0 0.0
    %319 = vmatmul.mubr.f32.gmra.mrb[0].mxu0 %v203
    %v320 = vpop.f32.mrb[0].mxu0
    %v321 = vadd.f32 %v227, %v320
    %v322 = vpop.f32.mrb[0].mxu0
    %323 = vmatprep.mubr.f32.mxu0 0.0
    %324 = vmatmul.mubr.f32.gmra.mrb[0].mxu0 %v204
    %v325 = vpop.f32.mrb[0].mxu0
    %v326 = vadd.f32 %v227, %v325
    %v327 = vpop.f32.mrb[0].mxu0
    %328 = vmatprep.mubr.f32.mxu0 0.0
    %329 = vmatmul.mubr.f32.gmra.mrb[0].mxu0 %v205
    %v330 = vpop.f32.mrb[0].mxu0
    %v331 = vadd.f32 %v227, %v330
    %v332 = vpop.f32.mrb[0].mxu0
    %333 = vdwg.mxu0
    %334 = vmax.xlane.f32.xlu0 %v296
    %v335 = vpop.xlane.xlu0 %334
    %336 = vmax.xlane.f32.xlu0 %v301
    %v337 = vpop.xlane.xlu0 %336
    %338 = vmax.xlane.f32.xlu0 %v306
    %v339 = vpop.xlane.xlu0 %338
    %340 = vmax.xlane.f32.xlu0 %v311
    %v341 = vpop.xlane.xlu0 %340
    %342 = vmax.xlane.f32.xlu0 %v316
    %v343 = vpop.xlane.xlu0 %342
    %344 = vmax.xlane.f32.xlu0 %v321
    %v345 = vpop.xlane.xlu0 %344
    %346 = vmax.xlane.f32.xlu0 %v326
    %v347 = vpop.xlane.xlu0 %346
    %348 = vmax.xlane.f32.xlu0 %v331
    %v349 = vpop.xlane.xlu0 %348
    %v350 = vsub.f32 %v296, %v335
    %v351 = vsub.f32 %v301, %v337
    %v352 = vsub.f32 %v306, %v339
    %v353 = vsub.f32 %v311, %v341
    %v354 = vsub.f32 %v316, %v343
    %v355 = vsub.f32 %v321, %v345
    %v356 = vsub.f32 %v326, %v347
    %v357 = vsub.f32 %v331, %v349
    %v358 = vmul.f32 %v350, 1.442695
    %v359 = vpow.pop %v358
    %v360 = vmul.f32 %v351, 1.442695
    %v361 = vpow.pop %v360
    %v362 = vmul.f32 %v352, 1.442695
    %v363 = vpow.pop %v362
    %v364 = vmul.f32 %v353, 1.442695
    %v365 = vpow.pop %v364
    %v366 = vmul.f32 %v354, 1.442695
    %v367 = vpow.pop %v366
    %v368 = vmul.f32 %v355, 1.442695
    %v369 = vpow.pop %v368
    %v370 = vmul.f32 %v356, 1.442695
    %v371 = vpow.pop %v370
    %v372 = vmul.f32 %v357, 1.442695
    %v373 = vpow.pop %v372
    %374 = vadd.xlane.f32.xlu0 %v359
    %v375 = vpop.xlane.xlu0 %374
    %376 = vadd.xlane.f32.xlu0 %v361
    %v377 = vpop.xlane.xlu0 %376
    %378 = vadd.xlane.f32.xlu0 %v363
    %v379 = vpop.xlane.xlu0 %378
    %380 = vadd.xlane.f32.xlu0 %v365
    %v381 = vpop.xlane.xlu0 %380
    %382 = vadd.xlane.f32.xlu0 %v367
    %v383 = vpop.xlane.xlu0 %382
    %384 = vadd.xlane.f32.xlu0 %v369
    %v385 = vpop.xlane.xlu0 %384
    %386 = vadd.xlane.f32.xlu0 %v371
    %v387 = vpop.xlane.xlu0 %386
    %388 = vadd.xlane.f32.xlu0 %v373
    %v389 = vpop.xlane.xlu0 %388
    %v390 = vlog2.pop %v375
    %v391 = vmul.f32 %v390, 0.6931472
    %v392 = vlog2.pop %v377
    %v393 = vmul.f32 %v392, 0.6931472
    %v394 = vlog2.pop %v379
    %v395 = vmul.f32 %v394, 0.6931472
    %v396 = vlog2.pop %v381
    %v397 = vmul.f32 %v396, 0.6931472
    %v398 = vlog2.pop %v383
    %v399 = vmul.f32 %v398, 0.6931472
    %v400 = vlog2.pop %v385
    %v401 = vmul.f32 %v400, 0.6931472
    %v402 = vlog2.pop %v387
    %v403 = vmul.f32 %v402, 0.6931472
    %v404 = vlog2.pop %v389
    %v405 = vmul.f32 %v404, 0.6931472
    %v406 = vsub.f32 %v350, %v391
    %v407 = vsub.f32 %v351, %v393
    %v408 = vsub.f32 %v352, %v395
    %v409 = vsub.f32 %v353, %v397
    %v410 = vsub.f32 %v354, %v399
    %v411 = vsub.f32 %v355, %v401
    %v412 = vsub.f32 %v356, %v403
    %v413 = vsub.f32 %v357, %v405
    %414 = vst [vmem:[#allocation8] sm:$0xff] %v406
    %415 = vst [vmem:[#allocation8 + $0x8] sm:$0xff] %v407
    %416 = vst [vmem:[#allocation8 + $0x10] sm:$0xff] %v408
    %417 = vst [vmem:[#allocation8 + $0x18] sm:$0xff] %v409
    %418 = vst [vmem:[#allocation8 + $0x20] sm:$0xff] %v410
    %419 = vst [vmem:[#allocation8 + $0x28] sm:$0xff] %v411
    %420 = vst [vmem:[#allocation8 + $0x30] sm:$0xff] %v412
    %421 = vst [vmem:[#allocation8 + $0x38] sm:$0xff] %v413
    // Predicated region
    $region34: #{tpu_custom_call.1} parent=1 // pred_check
      _
    $region35: #{tpu_custom_call.1} parent=1 // pred_check_branch
      %423 = sbr.rel (0) target = $region37
    $region36: #{tpu_custom_call.1} parent=1 // pred_region
      %s425 = ssub.s32 1024, 1024
      %426 = vsyncadd [#allocation4], %s425
      %s427 = sshll.u32 [#allocation8], 4
      %s428 = int_to_ptr.vmem [resolvable:$true] %s427
      %433 = dma.vmem_to_hbm [thread:$0]  %s428, 1024, %s5, [#allocation4], 128, 128, 8
    $region37: #{tpu_custom_call.1} parent=1 // pred_fallthru
      _
    // Predicated region
    $region38: #{tpu_custom_call.1} parent=1 // pred_check
      _
    $region39: #{tpu_custom_call.1} parent=1 // pred_check_branch
      %435 = sbr.rel (0) target = $region41
    $region40: #{tpu_custom_call.1} parent=1 // pred_region
      %436 = dma.done [#allocation4], 1024
    $region41: #{tpu_custom_call.1} parent=1 // pred_fallthru
      _
    %437 = vsyncpa [#allocation3], 1
    %438 = vsyncpa [#allocation6], 1
    %439 = vsyncpa [#allocation4], 1

</llo_original>
